<compile_context>
chip_gen: v7x
topology: tpu7x:2x2x1
jax: 0.10.0
libtpu: 0.0.40
codegen_flags: <defaults>
</compile_context>

<pallas_src>
import jax
import jax.numpy as jnp
from jax import lax
from jax.experimental import pallas as pl
from jax.experimental.pallas import tpu as pltpu


def _sir_kernel(x_ref, H_ref, rand_ref, beta_ref, gamma_ref, out_ref):
    # x_ref:    (3, N)            initial one-hot state, states-major
    # H_ref:    (steps-1, E, N)   dynamic hypergraph incidence matrices
    # rand_ref: (steps-1, 1, N)   uniform[0,1) draws, one per node per step
    # beta_ref, gamma_ref: (1, N)
    # out_ref:  (steps-1, 3, N)
    beta = beta_ref[...]                         # hoisted out of the time loop
    gamma = gamma_ref[...]
    n_steps = H_ref.shape[0]                     # static: steps - 1
    N = x_ref.shape[1]

    # Row-index iota used to build the one-hot next state densely (hoisted).
    row_iota = lax.broadcasted_iota(jnp.int32, (3, N), 0)

    def body(k, state):                          # state: (3, N) one-hot carry
        s_prev = state[0:1, :]
        i_prev = state[1:2, :]
        r_prev = state[2:3, :]

        H_t = H_ref[k]                           # (E, N)

        # Hyperedge message passing on the MXU (no explicit transposes):
        #   e = H_t @ I_prev^T   (contract node axis)       -> (E, 1)
        #   w = tanh(e)^T @ H_t  (contract hyperedge axis)  -> (1, N)
        e = lax.dot_general(H_t, i_prev,
                            dimension_numbers=(((1,), (1,)), ((), ())),
                            preferred_element_type=jnp.float32)
        w = lax.dot_general(jnp.tanh(e), H_t,
                            dimension_numbers=(((0,), (0,)), ((), ())),
                            preferred_element_type=jnp.float32)

        new_cases = beta * (s_prev * w)
        new_rec = gamma * i_prev

        s = jnp.maximum(s_prev - new_cases, 0.0)
        i_ = jnp.maximum(i_prev + new_cases - new_rec, 0.0)
        r = jnp.maximum(r_prev + new_rec, 0.0)

        # Normalization divide elided: comparisons & argmax are scale
        # invariant, so compare rand * total against unnormalized probs.
        total = s + i_ + r
        rt = rand_ref[k] * total                 # (1, N)

        cond1 = (s_prev == 1.0) & (rt < i_ * 0.8)              # S -> I
        cond2 = (s_prev != 1.0) & (i_prev == 1.0) & (rt < r)   # I -> R

        # argmax over (S, I, R) with first-occurrence tie-break.
        am_s = (s >= i_) & (s >= r)
        am_i = jnp.logical_not(am_s) & (i_ >= r)
        argmax_idx = jnp.where(am_s, 0, jnp.where(am_i, 1, 2))      # (1, N)
        idx = jnp.where(cond1, 1, jnp.where(cond2, 2, argmax_idx))  # (1, N)

        new_state = (row_iota == idx).astype(jnp.float32)           # (3, N)
        out_ref[k] = new_state
        return new_state

    lax.fori_loop(0, n_steps, body, x_ref[...])


def hypernet_sir_forward(x, H, beta, gamma, steps, rng_key=None):
    """x: (N, 3) one-hot states; H: (>=steps-1, E, N) incidence.

    Returns (steps, N, 3) with step 0 equal to x, matching the PyTorch module.
    """
    N = x.shape[0]
    E = H.shape[1]
    x0 = x.astype(jnp.float32)
    n_inner = steps - 1
    if n_inner <= 0:
        return x0[None]
    assert H.shape[0] >= n_inner and H.shape[2] == N

    x_t = x0.T                                            # (3, N) states-major
    H_f = H[:n_inner].astype(jnp.float32)                 # (steps-1, E, N)
    beta2 = beta.astype(jnp.float32).reshape(1, N)
    gamma2 = gamma.astype(jnp.float32).reshape(1, N)
    if rng_key is None:
        rng_key = jax.random.PRNGKey(0)
    rand = jax.random.uniform(rng_key, (n_inner, 1, N), dtype=jnp.float32)

    out = pl.pallas_call(
        _sir_kernel,
        out_shape=jax.ShapeDtypeStruct((n_inner, 3, N), jnp.float32),
        grid=(1,),                                        # single invocation
        in_specs=[
            pl.BlockSpec((3, N), lambda i: (0, 0)),              # x (transposed)
            pl.BlockSpec((n_inner, E, N), lambda i: (0, 0, 0)),  # all H[t]
            pl.BlockSpec((n_inner, 1, N), lambda i: (0, 0, 0)),  # uniforms
            pl.BlockSpec((1, N), lambda i: (0, 0)),              # beta
            pl.BlockSpec((1, N), lambda i: (0, 0)),              # gamma
        ],
        out_specs=pl.BlockSpec((n_inner, 3, N), lambda i: (0, 0, 0)),
        compiler_params=pltpu.CompilerParams(
            dimension_semantics=("arbitrary",)),
    )(x_t, H_f, rand, beta2, gamma2)

    out_nodes_states = jnp.transpose(out, (0, 2, 1))      # (steps-1, N, 3)
    return jnp.concatenate([x0[None], out_nodes_states], axis=0)


if __name__ == "__main__":
    key = jax.random.PRNGKey(0)
    N, E, steps = 128, 16, 8          # num_nodes, num_hyperedges, horizon

    k1, k2, k3 = jax.random.split(key, 3)
    # Initial one-hot states: ~10% infected, rest susceptible.
    infected = jax.random.bernoulli(k1, 0.1, (N,))
    state_idx = jnp.where(infected, 1, 0)
    x = jax.nn.one_hot(state_idx, 3, dtype=jnp.float32)             # (N, 3)
    # Dynamic hypergraph incidence matrices (0/1 entries).
    H = jax.random.bernoulli(k2, 0.3, (steps, E, N)).astype(jnp.float32)

    # Parameters from __init__ (deterministic): beta/gamma filled with the
    # given rates; nn.Linear(10, 20)/softmax/relu are unused in forward.
    beta = jnp.full((N,), 0.01, dtype=jnp.float32)
    gamma = jnp.full((N,), 0.038, dtype=jnp.float32)

    out = hypernet_sir_forward(x, H, beta, gamma, steps=steps, rng_key=k3)
    out = jax.block_until_ready(out)
    assert out.shape == (steps, N, 3)
    assert out.dtype == jnp.float32
    # Every row (including steps after 0) must be an exact one-hot state.
    assert bool(jnp.all(jnp.sum(out, axis=-1) == 1.0))
    print("KERNEL_OK")
</pallas_src>

<mosaic_0001>
module attributes {stable_mosaic.version = 11 : i64} {
  func.func @_sir_kernel(%arg0: i32, %arg1: memref<3x128xf32, #tpu.memory_space<vmem>>, %arg2: memref<7x16x128xf32, #tpu.memory_space<vmem>>, %arg3: memref<7x1x128xf32, #tpu.memory_space<vmem>>, %arg4: memref<1x128xf32, #tpu.memory_space<vmem>>, %arg5: memref<1x128xf32, #tpu.memory_space<vmem>>, %arg6: memref<7x3x128xf32, #tpu.memory_space<vmem>>) attributes {dimension_semantics = [#tpu.dimension_semantics<arbitrary>], iteration_bounds = array<i64: 1>, scalar_prefetch = 0 : i64, scratch_operands = 0 : i64, tpu.core_type = #tpu.core_type<tc>, window_params = [{pipeline_mode = #tpu.pipeline_mode<synchronous>, transform_indices = @transform_0, window_bounds = array<i64: 3, 128>}, {pipeline_mode = #tpu.pipeline_mode<synchronous>, transform_indices = @transform_1, window_bounds = array<i64: 7, 16, 128>}, {pipeline_mode = #tpu.pipeline_mode<synchronous>, transform_indices = @transform_2, window_bounds = array<i64: 7, 1, 128>}, {pipeline_mode = #tpu.pipeline_mode<synchronous>, transform_indices = @transform_3, window_bounds = array<i64: 1, 128>}, {pipeline_mode = #tpu.pipeline_mode<synchronous>, transform_indices = @transform_4, window_bounds = array<i64: 1, 128>}, {pipeline_mode = #tpu.pipeline_mode<synchronous>, transform_indices = @transform_5, window_bounds = array<i64: 7, 3, 128>}]} {
    %c0 = arith.constant 0 : index
    %c0_0 = arith.constant 0 : index
    %0 = vector.load %arg4[%c0, %c0_0] : memref<1x128xf32, #tpu.memory_space<vmem>>, vector<1x128xf32>
    %c0_1 = arith.constant 0 : index
    %c0_2 = arith.constant 0 : index
    %1 = vector.load %arg5[%c0_1, %c0_2] : memref<1x128xf32, #tpu.memory_space<vmem>>, vector<1x128xf32>
    %2 = tpu.iota {dimensions = array<i32: 0>} : vector<3x128xi32>
    %c0_3 = arith.constant 0 : index
    %c0_4 = arith.constant 0 : index
    %3 = vector.load %arg1[%c0_3, %c0_4] : memref<3x128xf32, #tpu.memory_space<vmem>>, vector<3x128xf32>
    %c0_i32 = arith.constant 0 : i32
    %c7_i32 = arith.constant 7 : i32
    %4 = arith.addi %c0_i32, %c7_i32 : i32
    %c1_i32 = arith.constant 1 : i32
    %5 = scf.for %arg7 = %c0_i32 to %4 step %c1_i32 iter_args(%arg8 = %3) -> (vector<3x128xf32>)  : i32 {
      %6 = vector.extract_strided_slice %arg8 {offsets = [0, 0], sizes = [1, 128], strides = [1, 1]} : vector<3x128xf32> to vector<1x128xf32>
      %7 = vector.extract_strided_slice %arg8 {offsets = [1, 0], sizes = [1, 128], strides = [1, 1]} : vector<3x128xf32> to vector<1x128xf32>
      %8 = vector.extract_strided_slice %arg8 {offsets = [2, 0], sizes = [1, 128], strides = [1, 1]} : vector<3x128xf32> to vector<1x128xf32>
      %9 = arith.index_cast %arg7 : i32 to index
      %c0_6 = arith.constant 0 : index
      %c0_7 = arith.constant 0 : index
      %10 = vector.load %arg2[%9, %c0_6, %c0_7] : memref<7x16x128xf32, #tpu.memory_space<vmem>>, vector<1x16x128xf32>
      %11 = vector.shape_cast %10 : vector<1x16x128xf32> to vector<16x128xf32>
      %cst = arith.constant dense<0.000000e+00> : vector<16x1xf32>
      %12 = tpu.matmul %11, %7, %cst {dimension_numbers = #tpu.dot_dimension_numbers<[1], [1], [0], [0], [0, 0, 1, 0], [], []>} : vector<16x128xf32>, vector<1x128xf32>, vector<16x1xf32> -> vector<16x1xf32>
      %13 = math.tanh %12 : vector<16x1xf32>
      %cst_8 = arith.constant dense<0.000000e+00> : vector<1x128xf32>
      %14 = tpu.matmul %13, %11, %cst_8 {dimension_numbers = #tpu.dot_dimension_numbers<[0], [0], [1], [1], [0, 1, 1, 1], [], []>} : vector<16x1xf32>, vector<16x128xf32>, vector<1x128xf32> -> vector<1x128xf32>
      %15 = arith.mulf %6, %14 : vector<1x128xf32>
      %16 = arith.mulf %0, %15 : vector<1x128xf32>
      %17 = arith.mulf %1, %7 : vector<1x128xf32>
      %18 = arith.subf %6, %16 : vector<1x128xf32>
      %cst_9 = arith.constant 0.000000e+00 : f32
      %19 = vector.broadcast %cst_9 : f32 to vector<1x128xf32>
      %20 = arith.maximumf %18, %19 : vector<1x128xf32>
      %21 = arith.addf %7, %16 : vector<1x128xf32>
      %22 = arith.subf %21, %17 : vector<1x128xf32>
      %cst_10 = arith.constant 0.000000e+00 : f32
      %23 = vector.broadcast %cst_10 : f32 to vector<1x128xf32>
      %24 = arith.maximumf %22, %23 : vector<1x128xf32>
      %25 = arith.addf %8, %17 : vector<1x128xf32>
      %cst_11 = arith.constant 0.000000e+00 : f32
      %26 = vector.broadcast %cst_11 : f32 to vector<1x128xf32>
      %27 = arith.maximumf %25, %26 : vector<1x128xf32>
      %28 = arith.addf %20, %24 : vector<1x128xf32>
      %29 = arith.addf %28, %27 : vector<1x128xf32>
      %30 = arith.index_cast %arg7 : i32 to index
      %c0_12 = arith.constant 0 : index
      %c0_13 = arith.constant 0 : index
      %31 = vector.load %arg3[%30, %c0_12, %c0_13] : memref<7x1x128xf32, #tpu.memory_space<vmem>>, vector<1x1x128xf32>
      %32 = vector.shape_cast %31 : vector<1x1x128xf32> to vector<1x128xf32>
      %33 = arith.mulf %32, %29 : vector<1x128xf32>
      %cst_14 = arith.constant 1.000000e+00 : f32
      %34 = vector.broadcast %cst_14 : f32 to vector<1x128xf32>
      %35 = arith.cmpf oeq, %6, %34 : vector<1x128xf32>
      %cst_15 = arith.constant 8.000000e-01 : f32
      %36 = vector.broadcast %cst_15 : f32 to vector<1x128xf32>
      %37 = arith.mulf %24, %36 : vector<1x128xf32>
      %38 = arith.cmpf olt, %33, %37 : vector<1x128xf32>
      %39 = arith.andi %35, %38 : vector<1x128xi1>
      %cst_16 = arith.constant 1.000000e+00 : f32
      %40 = vector.broadcast %cst_16 : f32 to vector<1x128xf32>
      %41 = arith.cmpf one, %6, %40 : vector<1x128xf32>
      %cst_17 = arith.constant 1.000000e+00 : f32
      %42 = vector.broadcast %cst_17 : f32 to vector<1x128xf32>
      %43 = arith.cmpf oeq, %7, %42 : vector<1x128xf32>
      %44 = arith.andi %41, %43 : vector<1x128xi1>
      %45 = arith.cmpf olt, %33, %27 : vector<1x128xf32>
      %46 = arith.andi %44, %45 : vector<1x128xi1>
      %47 = arith.cmpf oge, %20, %24 : vector<1x128xf32>
      %48 = arith.cmpf oge, %20, %27 : vector<1x128xf32>
      %49 = arith.andi %47, %48 : vector<1x128xi1>
      %cst_18 = arith.constant dense<true> : vector<1x128xi1>
      %50 = arith.xori %49, %cst_18 : vector<1x128xi1>
      %51 = arith.cmpf oge, %24, %27 : vector<1x128xf32>
      %52 = arith.andi %50, %51 : vector<1x128xi1>
      %c1_i32_19 = arith.constant 1 : i32
      %c2_i32 = arith.constant 2 : i32
      %53 = vector.broadcast %c1_i32_19 : i32 to vector<1x128xi32>
      %54 = vector.broadcast %c2_i32 : i32 to vector<1x128xi32>
      %55 = arith.select %52, %53, %54 : vector<1x128xi1>, vector<1x128xi32>
      %c0_i32_20 = arith.constant 0 : i32
      %56 = vector.broadcast %c0_i32_20 : i32 to vector<1x128xi32>
      %57 = arith.select %49, %56, %55 : vector<1x128xi1>, vector<1x128xi32>
      %c2_i32_21 = arith.constant 2 : i32
      %58 = vector.broadcast %c2_i32_21 : i32 to vector<1x128xi32>
      %59 = arith.select %46, %58, %57 : vector<1x128xi1>, vector<1x128xi32>
      %c1_i32_22 = arith.constant 1 : i32
      %60 = vector.broadcast %c1_i32_22 : i32 to vector<1x128xi32>
      %61 = arith.select %39, %60, %59 : vector<1x128xi1>, vector<1x128xi32>
      %62 = vector.broadcast %61 : vector<1x128xi32> to vector<3x128xi32>
      %63 = arith.cmpi eq, %2, %62 : vector<3x128xi32>
      %64 = arith.extui %63 : vector<3x128xi1> to vector<3x128xi32>
      %65 = arith.sitofp %64 : vector<3x128xi32> to vector<3x128xf32>
      %66 = arith.index_cast %arg7 : i32 to index
      %c0_23 = arith.constant 0 : index
      %c0_24 = arith.constant 0 : index
      %67 = vector.load %arg6[%66, %c0_23, %c0_24] : memref<7x3x128xf32, #tpu.memory_space<vmem>>, vector<1x3x128xf32>
      %68 = vector.shape_cast %67 : vector<1x3x128xf32> to vector<3x128xf32>
      %69 = vector.shape_cast %65 : vector<3x128xf32> to vector<1x3x128xf32>
      tpu.vector_store %arg6[%66, %c0_23, %c0_24], %69 {strides = array<i32>} : memref<7x3x128xf32, #tpu.memory_space<vmem>>, vector<1x3x128xf32>,
      scf.yield %65 : vector<3x128xf32>
    }
    %c7_i32_5 = arith.constant 7 : i32
    return
  }
  func.func @transform_0(%arg0: i32) -> (i32, i32) {
    %c0_i32 = arith.constant 0 : i32
    %c0_i32_0 = arith.constant 0 : i32
    %c0_i32_1 = arith.constant 0 : i32
    return %c0_i32, %c0_i32_0 : i32, i32
  }
  func.func @transform_1(%arg0: i32) -> (i32, i32, i32) {
    %c0_i32 = arith.constant 0 : i32
    %c0_i32_0 = arith.constant 0 : i32
    %c0_i32_1 = arith.constant 0 : i32
    %c0_i32_2 = arith.constant 0 : i32
    return %c0_i32, %c0_i32_0, %c0_i32_1 : i32, i32, i32
  }
  func.func @transform_2(%arg0: i32) -> (i32, i32, i32) {
    %c0_i32 = arith.constant 0 : i32
    %c0_i32_0 = arith.constant 0 : i32
    %c0_i32_1 = arith.constant 0 : i32
    %c0_i32_2 = arith.constant 0 : i32
    return %c0_i32, %c0_i32_0, %c0_i32_1 : i32, i32, i32
  }
  func.func @transform_3(%arg0: i32) -> (i32, i32) {
    %c0_i32 = arith.constant 0 : i32
    %c0_i32_0 = arith.constant 0 : i32
    %c0_i32_1 = arith.constant 0 : i32
    return %c0_i32, %c0_i32_0 : i32, i32
  }
  func.func @transform_4(%arg0: i32) -> (i32, i32) {
    %c0_i32 = arith.constant 0 : i32
    %c0_i32_0 = arith.constant 0 : i32
    %c0_i32_1 = arith.constant 0 : i32
    return %c0_i32, %c0_i32_0 : i32, i32
  }
  func.func @transform_5(%arg0: i32) -> (i32, i32, i32) {
    %c0_i32 = arith.constant 0 : i32
    %c0_i32_0 = arith.constant 0 : i32
    %c0_i32_1 = arith.constant 0 : i32
    %c0_i32_2 = arith.constant 0 : i32
    return %c0_i32, %c0_i32_0, %c0_i32_1 : i32, i32, i32
  }
}

</mosaic_0001>

<llo_original>
// kernel: tpu_custom_call.1
$region0: #{tpu_custom_call.1}
  #allocation0 [shape = 'u32[]', space=smem, size = 0x4, offset = 0x4, fixed_abs, tag = 'smem constant byte address 0x4 - core index']
  #allocation1 [shape = 'u32[144,128]{1,0:T(1,128)}', space=vmem, size = 0x12000, scoped, tag = 'internal scratch']
  %s0 = inlined_call_operand.hbm [shape: f32[3,128], index: 0, kind: input, shape index: {}]
  %s1 = inlined_call_operand.hbm [shape: f32[7,16,128], index: 1, kind: input, shape index: {}]
  %s2 = inlined_call_operand.vmem [shape: f32[7,1,128], index: 2, kind: input, shape index: {}]
  %s3 = inlined_call_operand.vmem [shape: f32[1,128], index: 3, kind: input, shape index: {}]
  %s4 = inlined_call_operand.vmem [shape: f32[1,128], index: 4, kind: input, shape index: {}]
  %s5 = inlined_call_operand.vmem [shape: f32[7,3,128], index: 5, kind: output, shape index: {}]
  %s6 = sld [smem:[#allocation0]]
  $region45: #{tpu_custom_call.1} parent=0
    _
  %s8 = ssub.s32 1, %s6
  %s9 = scalar_select 0, %s8, %s6
  $region1: #{tpu_custom_call.1} parent=0
    #allocation2 [shape = 'u8[2048]{0}', space=vmem, size = 0x800, scoped, tag = 'input window, operand 0, single buffered']
    #allocation3 [shape = 's32[1]{0}', space=sflag, size = 0x4, scoped, tag = 'scoped memory for tpu_custom_call.1']
    #allocation4 [shape = 'u8[57344]{0}', space=vmem, size = 0xe000, scoped, tag = 'input window, operand 1, single buffered']
    #allocation5 [shape = 's32[1]{0}', space=sflag, size = 0x4, scoped, tag = 'scoped memory for tpu_custom_call.1']
    %10 = vsyncpa [#allocation3], 0
    %11 = vsyncpa [#allocation5], 0
    // Predicated region
    $region2: #{tpu_custom_call.1} parent=1 // pred_check
      _
    $region3: #{tpu_custom_call.1} parent=1 // pred_check_branch
      %13 = sbr.rel (0) target = $region5
    $region4: #{tpu_custom_call.1} parent=1 // pred_region
      %s15 = ssub.s32 64, 64
      %16 = vsyncadd [#allocation3], %s15
      %s18 = sshll.u32 [#allocation2], 4
      %s19 = int_to_ptr.vmem [resolvable:$true] %s18
      %21 = dma.hbm_to_vmem [thread:$0]  %s0, 64, %s19, [#allocation3]
    $region5: #{tpu_custom_call.1} parent=1 // pred_fallthru
      _
    // Predicated region
    $region6: #{tpu_custom_call.1} parent=1 // pred_check
      _
    $region7: #{tpu_custom_call.1} parent=1 // pred_check_branch
      %23 = sbr.rel (0) target = $region9
    $region8: #{tpu_custom_call.1} parent=1 // pred_region
      %s25 = ssub.s32 1792, 1792
      %26 = vsyncadd [#allocation5], %s25
      %s27 = sshll.u32 [#allocation4], 4
      %s28 = int_to_ptr.vmem [resolvable:$true] %s27
      %33 = dma.hbm_to_vmem [thread:$0]  %s1, 1792, %s28, [#allocation5], 128, 128, 8
    $region9: #{tpu_custom_call.1} parent=1 // pred_fallthru
      _
    // Predicated region
    $region10: #{tpu_custom_call.1} parent=1 // pred_check
      _
    $region11: #{tpu_custom_call.1} parent=1 // pred_check_branch
      %35 = sbr.rel (0) target = $region13
    $region12: #{tpu_custom_call.1} parent=1 // pred_region
      _
    $region13: #{tpu_custom_call.1} parent=1 // pred_fallthru
      _
    // Predicated region
    $region14: #{tpu_custom_call.1} parent=1 // pred_check
      _
    $region15: #{tpu_custom_call.1} parent=1 // pred_check_branch
      %37 = sbr.rel (0) target = $region17
    $region16: #{tpu_custom_call.1} parent=1 // pred_region
      _
    $region17: #{tpu_custom_call.1} parent=1 // pred_fallthru
      _
    // Predicated region
    $region18: #{tpu_custom_call.1} parent=1 // pred_check
      _
    $region19: #{tpu_custom_call.1} parent=1 // pred_check_branch
      %39 = sbr.rel (0) target = $region21
    $region20: #{tpu_custom_call.1} parent=1 // pred_region
      _
    $region21: #{tpu_custom_call.1} parent=1 // pred_fallthru
      _
    // Predicated region
    $region22: #{tpu_custom_call.1} parent=1 // pred_check
      _
    $region23: #{tpu_custom_call.1} parent=1 // pred_check_branch
      %41 = sbr.rel (0) target = $region25
    $region24: #{tpu_custom_call.1} parent=1 // pred_region
      %42 = dma.done [#allocation3], 64
    $region25: #{tpu_custom_call.1} parent=1 // pred_fallthru
      _
    // Predicated region
    $region26: #{tpu_custom_call.1} parent=1 // pred_check
      _
    $region27: #{tpu_custom_call.1} parent=1 // pred_check_branch
      %44 = sbr.rel (0) target = $region29
    $region28: #{tpu_custom_call.1} parent=1 // pred_region
      %45 = dma.done [#allocation5], 1792
    $region29: #{tpu_custom_call.1} parent=1 // pred_fallthru
      _
    %v46 = vld [vmem:[%s3] sm:$0x1]
    %v47 = vld [vmem:[%s4] sm:$0x1]
    %v48 = vlaneseq
    %v49 = vshrl.u32 %v48, 7
    %v50 = vld [vmem:[#allocation2] sm:$0x7]
    loop: start=0, step=1, limit=7
    $region30: #{tpu_custom_call.1} parent=1 // loop_pre_header
      _
    $region31: #{tpu_custom_call.1} parent=1 // loop_header
      %s52 = sphi 0, %s56
      %p53 = scmp.ge.s32.totalorder %s52, 7
      %v57 = vphi %v50, %v295
    $region32: #{tpu_custom_call.1} parent=1 // loop_header_branch
      %55 = sbr.rel (%p53) target = $region36
    $region33: #{tpu_custom_call.1} parent=1 // loop_body
      %s58 = smul.u32 %s52, 16
      %s59 = scalar_lea.vmem [#allocation4], %s58
      %v60 = vld [vmem:[%s59] sm:$0xff]
      %v61 = vld [vmem:[%s59 + $0x8] sm:$0xff]
      %v62 = vlaneseq
      %v63 = vshrl.u32 %v62, 7
      %v64 = vsub.s32 1, %v63
      %v65 = vrot.slane %v57, %v64
      %v66 = vmul.f32 %v60, %v65
      %v67 = vmul.f32 %v61, %v65
      %68 = vadd.xlane.f32.xlu0 %v66
      %v69 = vpop.xlane.xlu0 %68
      %70 = vadd.xlane.f32.xlu0 %v67
      %v71 = vpop.xlane.xlu0 %70
      %v72 = vtanh.pop %v69
      %v73 = vtanh.pop %v71
      %74 = vxpose.xlu0.b32.start [1/16] %v72, 128
      %75 = vxpose.xlu0.b32.cont [2/16] %v73, 128
      %76 = vxpose.xlu0.b32.cont [3/16] 0.0, 128
      %77 = vxpose.xlu0.b32.cont [4/16] 0.0, 128
      %78 = vxpose.xlu0.b32.cont [5/16] 0.0, 128
      %79 = vxpose.xlu0.b32.cont [6/16] 0.0, 128
      %80 = vxpose.xlu0.b32.cont [7/16] 0.0, 128
      %81 = vxpose.xlu0.b32.cont [8/16] 0.0, 128
      %82 = vxpose.xlu0.b32.cont [9/16] 0.0, 128
      %83 = vxpose.xlu0.b32.cont [10/16] 0.0, 128
      %84 = vxpose.xlu0.b32.cont [11/16] 0.0, 128
      %85 = vxpose.xlu0.b32.cont [12/16] 0.0, 128
      %86 = vxpose.xlu0.b32.cont [13/16] 0.0, 128
      %87 = vxpose.xlu0.b32.cont [14/16] 0.0, 128
      %88 = vxpose.xlu0.b32.cont [15/16] 0.0, 128
      %89 = vxpose.xlu0.b32.end [16/16] 0.0, 128
      %v90 = vpop.trf.xlu0
      %v91 = vpop.trf.xlu0
      %v92 = vpop.trf.xlu0
      %v93 = vpop.trf.xlu0
      %v94 = vpop.trf.xlu0
      %v95 = vpop.trf.xlu0
      %v96 = vpop.trf.xlu0
      %v97 = vpop.trf.xlu0
      %v98 = vpop.trf.xlu0
      %v99 = vpop.trf.xlu0
      %v100 = vpop.trf.xlu0
      %v101 = vpop.trf.xlu0
      %v102 = vpop.trf.xlu0
      %v103 = vpop.trf.xlu0
      %v104 = vpop.trf.xlu0
      %v105 = vpop.trf.xlu0
      %vm106 = vcmask 130048
      %v108 = vsel %vm106, %v90, 0
      %110 = vmatprep.subr.mxu0 0.0
      %111 = vmatpush1.msra.mxu0 %v60
      %112 = vmatprep.subr.mxu0 0.0
      %113 = vmatpush1.msra.mxu0 %v61
      %114 = vmatprep.subr.mxu0 0.0
      %115 = vmatpush1.msra.mxu0 0.0
      %116 = vmatprep.subr.mxu0 0.0
      %117 = vmatpush1.msra.mxu0 0.0
      %118 = vmatprep.subr.mxu0 0.0
      %119 = vmatpush1.msra.mxu0 0.0
      %120 = vmatprep.subr.mxu0 0.0
      %121 = vmatpush1.msra.mxu0 0.0
      %122 = vmatprep.subr.mxu0 0.0
      %123 = vmatpush1.msra.mxu0 0.0
      %124 = vmatprep.subr.mxu0 0.0
      %125 = vmatpush1.msra.mxu0 0.0
      %126 = vmatprep.subr.mxu0 0.0
      %127 = vmatpush1.msra.mxu0 0.0
      %128 = vmatprep.subr.mxu0 0.0
      %129 = vmatpush1.msra.mxu0 0.0
      %130 = vmatprep.subr.mxu0 0.0
      %131 = vmatpush1.msra.mxu0 0.0
      %132 = vmatprep.subr.mxu0 0.0
      %133 = vmatpush1.msra.mxu0 0.0
      %134 = vmatprep.subr.mxu0 0.0
      %135 = vmatpush1.msra.mxu0 0.0
      %136 = vmatprep.subr.mxu0 0.0
      %137 = vmatpush1.msra.mxu0 0.0
      %138 = vmatprep.subr.mxu0 0.0
      %139 = vmatpush1.msra.mxu0 0.0
      %140 = vmatprep.subr.mxu0 0.0
      %141 = vmatpush1.msra.mxu0 0.0
      %142 = vmatprep.subr.mxu0 0.0
      %143 = vmatpush1.msra.mxu0 0.0
      %144 = vmatprep.subr.mxu0 0.0
      %145 = vmatpush1.msra.mxu0 0.0
      %146 = vmatprep.subr.mxu0 0.0
      %147 = vmatpush1.msra.mxu0 0.0
      %148 = vmatprep.subr.mxu0 0.0
      %149 = vmatpush1.msra.mxu0 0.0
      %150 = vmatprep.subr.mxu0 0.0
      %151 = vmatpush1.msra.mxu0 0.0
      %152 = vmatprep.subr.mxu0 0.0
      %153 = vmatpush1.msra.mxu0 0.0
      %154 = vmatprep.subr.mxu0 0.0
      %155 = vmatpush1.msra.mxu0 0.0
      %156 = vmatprep.subr.mxu0 0.0
      %157 = vmatpush1.msra.mxu0 0.0
      %158 = vmatprep.subr.mxu0 0.0
      %159 = vmatpush1.msra.mxu0 0.0
      %160 = vmatprep.subr.mxu0 0.0
      %161 = vmatpush1.msra.mxu0 0.0
      %162 = vmatprep.subr.mxu0 0.0
      %163 = vmatpush1.msra.mxu0 0.0
      %164 = vmatprep.subr.mxu0 0.0
      %165 = vmatpush1.msra.mxu0 0.0
      %166 = vmatprep.subr.mxu0 0.0
      %167 = vmatpush1.msra.mxu0 0.0
      %168 = vmatprep.subr.mxu0 0.0
      %169 = vmatpush1.msra.mxu0 0.0
      %170 = vmatprep.subr.mxu0 0.0
      %171 = vmatpush1.msra.mxu0 0.0
      %172 = vmatprep.subr.mxu0 0.0
      %173 = vmatpush1.msra.mxu0 0.0
      %174 = vmatprep.mubr.f32.mxu0 0.0
      %175 = vmatmul.mubr.f32.gmra.mrb[0].mxu0 %v108
      %v176 = vpop.f32.mrb[0].mxu0
      %v177 = vadd.f32 0.0, %v176
      %v178 = vpop.f32.mrb[0].mxu0
      %179 = vdwg.mxu0
      %v180 = vmul.f32 %v57, %v177
      %v181 = vmul.f32 %v46, %v180
      %v184 = vunpack.c.l.s4 1966171168
      %v185 = vunpack.c.0.s8 %v184
      %v186 = vlaneseq
      %v187 = vshrl.u32 %v186, 7
      %v188 = vsub.s32 %v185, %v187
      %v189 = vrot.slane %v57, %v188
      %v190 = vcombine.high %v189, %v189
      %v192 = vunpack.c.l.s4 1966171168
      %v193 = vunpack.c.0.s8 %v192
      %v194 = vlaneseq
      %v195 = vshrl.u32 %v194, 7
      %v196 = vsub.s32 %v193, %v195
      %v197 = vrot.slane %v190, %v196
      %v199 = vmul.f32 %v47, %v197
      %v200 = vsub.f32 %v57, %v181
      %v201 = vmax.f32 %v200, 0.0
      %v203 = vlaneseq
      %v204 = vshrl.u32 %v203, 7
      %v205 = vsub.s32 0, %v204
      %v206 = vrot.slane %v181, %v205
      %v208 = vadd.f32 %v57, %v206
      %v210 = vlaneseq
      %v211 = vshrl.u32 %v210, 7
      %v212 = vsub.s32 0, %v211
      %v213 = vrot.slane %v199, %v212
      %v215 = vsub.f32 %v208, %v213
      %v216 = vmax.f32 %v215, 0.0
      %v217 = vadd.f32 %v57, %v213
      %v218 = vmax.f32 %v217, 0.0
      %v220 = vrot.slane %v216, 1
      %v222 = vadd.f32 %v201, %v220
      %v224 = vrot.slane %v218, 2
      %v226 = vadd.f32 %v222, %v224
      %s227 = scalar_lea.vmem %s2, %s52
      %v228 = vld [vmem:[%s227] sm:$0x1]
      %v229 = vmul.f32 %v228, %v226
      %vm230 = vcmp.eq.f32.partialorder %v57, 1.0
      %v231 = vmul.f32 %v216, 0.8
      %v234 = vunpack.c.l.s4 1966171168
      %v235 = vunpack.c.0.s8 %v234
      %v236 = vlaneseq
      %v237 = vshrl.u32 %v236, 7
      %v238 = vsub.s32 %v235, %v237
      %v239 = vrot.slane %v231, %v238
      %v240 = vcombine.high %v239, %v239
      %v242 = vunpack.c.l.s4 1966171168
      %v243 = vunpack.c.0.s8 %v242
      %v244 = vlaneseq
      %v245 = vshrl.u32 %v244, 7
      %v246 = vsub.s32 %v243, %v245
      %v247 = vrot.slane %v240, %v246
      %vm249 = vcmp.lt.f32.partialorder %v229, %v247
      %vm250 = vmand %vm230, %vm249
      %vm251 = vcmp.ne.f32.partialorder %v57, 1.0
      %v252 = vsel %vm230, 1, 0
      %v253 = vrot.slane %v252, 1
      %vm254 = vcmp.ne.s32.totalorder %v253, 0
      %vm255 = vmand %vm251, %vm254
      %v257 = vunpack.c.l.s4 1966171168
      %v258 = vunpack.c.0.s8 %v257
      %v259 = vlaneseq
      %v260 = vshrl.u32 %v259, 7
      %v261 = vsub.s32 %v258, %v260
      %v262 = vrot.slane %v218, %v261
      %v264 = vunpack.c.l.s4 1966171168
      %v265 = vunpack.c.0.s8 %v264
      %v266 = vlaneseq
      %v267 = vshrl.u32 %v266, 7
      %v268 = vsub.s32 %v265, %v267
      %v269 = vrot.slane %v262, %v268
      %v270 = vcombine.high %v269, %v269
      %vm272 = vcmp.lt.f32.partialorder %v229, %v270
      %vm273 = vmand %vm255, %vm272
      %vm274 = vcmp.ge.f32.partialorder %v201, %v220
      %vm275 = vcmp.ge.f32.partialorder %v201, %v224
      %vm276 = vmand %vm274, %vm275
      %vm277 = vmxor %vm276, 1
      %v278 = vrot.slane %v218, 1
      %vm280 = vcmp.ge.f32.partialorder %v216, %v278
      %v281 = vsel %vm280, 1, 0
      %v282 = vrot.slane %v281, 1
      %vm283 = vcmp.ne.s32.totalorder %v282, 0
      %vm284 = vmand %vm277, %vm283
      %v285 = vsel %vm284, 1, 2
      %v286 = vsel %vm276, 0, %v285
      %v287 = vsel %vm273, 2, %v286
      %v288 = vsel %vm250, 1, %v287
      %v289 = vlaneseq
      %v290 = vshrl.u32 %v289, 7
      %v291 = vsub.s32 0, %v290
      %v292 = vrot.slane %v288, %v291
      %vm293 = vcmp.eq.s32.totalorder %v49, %v292
      %v294 = vsel %vm293, 1, 0
      %v295 = vcvt.s32.f32 %v294
      %s296 = smul.u32 %s52, 4
      %s297 = scalar_lea.vmem %s5, %s296
      %298 = vst [vmem:[%s297] sm:$0x7] %v295
    $region34: #{tpu_custom_call.1} parent=1 // loop_footer
      %s56 = sadd.s32 1, %s52
    $region35: #{tpu_custom_call.1} parent=1 // loop_footer_branch
      %51 = sbr.rel target = $region31
    $region36: #{tpu_custom_call.1} parent=1 // loop_exit
      _
    // Predicated region
    $region37: #{tpu_custom_call.1} parent=1 // pred_check
      _
    $region38: #{tpu_custom_call.1} parent=1 // pred_check_branch
      %300 = sbr.rel (0) target = $region40
    $region39: #{tpu_custom_call.1} parent=1 // pred_region
      _
    $region40: #{tpu_custom_call.1} parent=1 // pred_fallthru
      _
    // Predicated region
    $region41: #{tpu_custom_call.1} parent=1 // pred_check
      _
    $region42: #{tpu_custom_call.1} parent=1 // pred_check_branch
      %302 = sbr.rel (0) target = $region44
    $region43: #{tpu_custom_call.1} parent=1 // pred_region
      _
    $region44: #{tpu_custom_call.1} parent=1 // pred_fallthru
      _
    %303 = vsyncpa [#allocation3], 1
    %304 = vsyncpa [#allocation5], 1

</llo_original>
